<compile_context>
chip_gen: v7x
topology: tpu7x:2x2x1
jax: 0.10.0
libtpu: 0.0.40
codegen_flags: <defaults>
</compile_context>

<pallas_src>
import functools

import jax
import jax.numpy as jnp
from jax import lax
from jax.experimental import pallas as pl
from jax.experimental.pallas import tpu as pltpu


# ----------------------------------------------------------------------------
# Fused kernel: sigmoid focal loss (per-batch partial sums) + cardinality
# ----------------------------------------------------------------------------
def _focal_card_kernel(
    logits_ref,      # (1, TQ, C)  model dtype (bf16/f32)
    tgt_ref,         # (1, TQ, 1)  int32 class ids (num_classes == background)
    focal_ref,       # SMEM (B,)   f32: per-batch raw focal-loss sums
    card_ref,        # SMEM (B,)   f32: per-batch count of non-background argmax
    *, num_classes, tq, q_total, alpha, gamma, need_row_mask,
):
    b = pl.program_id(0)
    qt = pl.program_id(1)
    C = num_classes

    @pl.when(qt == 0)
    def _init():
        focal_ref[b] = jnp.float32(0.0)
        card_ref[b] = jnp.float32(0.0)

    x = logits_ref[0].astype(jnp.float32)                       # (TQ, C)
    cls = tgt_ref[0]                                            # (TQ, 1) int32
    lane = lax.broadcasted_iota(jnp.int32, (tq, C), 1)

    if need_row_mask:
        # Partial last tile (Q % tq != 0): mask rows past Q and neutralize the
        # out-of-bounds logits BEFORE exp so no NaN/Inf can leak into the sums.
        row = lax.broadcasted_iota(jnp.int32, (tq, 1), 0)
        valid = (qt * tq + row) < q_total                       # (TQ, 1) bool
        validf = valid.astype(jnp.float32)
        x = jnp.where(valid, x, 0.0)

    # One-hot built on the fly (class id == num_classes -> all-zero row, which
    # matches the reference's onehot-over-(C+1)-then-drop-last behaviour).
    t = (lane == cls).astype(jnp.float32)

    # ---- sigmoid focal loss (1 exp + 1 log + 1 EUP reciprocal per element) ----
    e = jnp.exp(-x)
    prob = pl.reciprocal(1.0 + e, approx=True)                  # sigmoid, EUP recip
    # BCE-with-logits reusing the sigmoid: -log(p or 1-p) == log1p(exp(-|x|))
    logp = jnp.log(jnp.where(x >= 0.0, prob, 1.0 - prob))
    ce = jnp.maximum(x, 0.0) - x * t - logp
    # 1 - p_t = prob + t * (1 - 2*prob)   (folded, fewer VALU ops)
    one_m_pt = prob + t * (1.0 - 2.0 * prob)
    if float(gamma) == 2.0:
        mod = one_m_pt * one_m_pt
    elif float(gamma) == 1.0:
        mod = one_m_pt
    else:
        mod = jnp.power(jnp.maximum(one_m_pt, 1e-12), gamma)    # eps-guard for pow
    loss = ce * mod
    if float(alpha) >= 0.0:
        # alpha*t + (1-alpha)*(1-t) == (1-alpha) + (2*alpha-1)*t
        loss = ((1.0 - alpha) + (2.0 * alpha - 1.0) * t) * loss
    if need_row_mask:
        loss = loss * validf

    focal_ref[b] = focal_ref[b] + jnp.sum(loss)

    # ---- fused cardinality: argmax over classes != C-1 (full-width masked) ----
    neg_inf = jnp.float32(-jnp.inf)
    fg_max = jnp.max(jnp.where(lane < C - 1, x, neg_inf), axis=1, keepdims=True)
    bg = jnp.max(jnp.where(lane == C - 1, x, neg_inf), axis=1, keepdims=True)
    not_bg = (fg_max >= bg).astype(jnp.float32)                 # ties -> first index
    if need_row_mask:
        not_bg = not_bg * validf
    card_ref[b] = card_ref[b] + jnp.sum(not_bg)


# ----------------------------------------------------------------------------
# Tiling / wrapper
# ----------------------------------------------------------------------------
def _vmem_capacity_bytes():
    try:
        return int(pltpu.get_tpu_info().vmem_capacity_bytes)
    except Exception:
        return 64 * 1024 * 1024          # conservative (v7x per-core VMEM)


def _pick_q_tile(q, c, itemsize, budget_bytes):
    """Pick the query tile.  Returns (tq, n_qt, need_row_mask)."""
    # Per query row in VMEM: double-buffered logits + double-buffered int32 id
    # + ~10 f32 element-wise temporaries live during the focal math.
    per_row = 2 * c * itemsize + 2 * 4 + 10 * c * 4
    cap = max(8, int(budget_bytes) // per_row)
    if q <= cap:
        # One full-extent tile along queries -> grid (B, 1), no padding, no mask.
        return q, 1, False
    tq = min((cap // 8) * 8, 8192)
    n_qt = -(-q // tq)
    return tq, n_qt, (tq * n_qt != q)


def fused_focal_cardinality(pred_logits, target_classes, *, focal_alpha, focal_gamma):
    """Returns (per-batch raw focal-loss sums, per-batch cardinality counts)."""
    B, Q, C = pred_logits.shape
    itemsize = pred_logits.dtype.itemsize

    vmem_cap = _vmem_capacity_bytes()
    vmem_limit = min((vmem_cap * 3) // 4, 100 * 1024 * 1024)
    tq, n_qt, need_row_mask = _pick_q_tile(Q, C, itemsize, vmem_limit // 2)

    tgt3 = target_classes.astype(jnp.int32).reshape(B, Q, 1)

    kernel = functools.partial(
        _focal_card_kernel, num_classes=C, tq=tq, q_total=Q,
        alpha=float(focal_alpha), gamma=float(focal_gamma),
        need_row_mask=need_row_mask)

    out_shapes = (
        jax.ShapeDtypeStruct((B,), jnp.float32),   # per-batch raw focal sums
        jax.ShapeDtypeStruct((B,), jnp.float32),   # per-batch cardinality counts
    )
    grid_spec = pltpu.PrefetchScalarGridSpec(
        num_scalar_prefetch=0,
        grid=(B, n_qt),
        in_specs=[
            pl.BlockSpec((1, tq, C), lambda b, qt: (b, qt, 0)),   # logits tile
            pl.BlockSpec((1, tq, 1), lambda b, qt: (b, qt, 0)),   # class-id column
        ],
        out_specs=(
            pl.BlockSpec(memory_space=pltpu.MemorySpace.SMEM),
            pl.BlockSpec(memory_space=pltpu.MemorySpace.SMEM),
        ),
    )
    cost = pl.CostEstimate(
        flops=22 * B * Q * C,
        transcendentals=3 * B * Q * C,
        bytes_accessed=B * Q * C * itemsize + B * Q * 4 + 2 * B * 4)

    focal_sums, card_counts = pl.pallas_call(
        kernel,
        out_shape=out_shapes,
        grid_spec=grid_spec,
        compiler_params=pltpu.CompilerParams(
            dimension_semantics=("parallel", "arbitrary"),   # batch axis megacore-safe
            vmem_limit_bytes=int(vmem_limit)),
        cost_estimate=cost,
    )(pred_logits, tgt3)
    return focal_sums, card_counts


def counter_loss_jnp(pred_count, counter_target, weight, *, gau_mask, beta):
    """cross_entropy_with_gaussian_mask — B x L (~2 x 28) elements; plain XLA is
    cheaper than carrying it as resident inputs in the Pallas kernel."""
    x = pred_count.astype(jnp.float32)
    _, L = x.shape
    t = jax.nn.one_hot(counter_target, L, dtype=jnp.float32)
    w = (1.0 - weight.astype(jnp.float32))[None, :]
    bce = (jnp.maximum(x, 0.0) - x * t + jnp.log1p(jnp.exp(-jnp.abs(x)))) * w
    if gau_mask:
        cols = jnp.arange(L, dtype=jnp.float32)[None, :]
        mu = counter_target.astype(jnp.float32)[:, None]
        mask = jnp.exp(-((cols - mu) ** 2) / 8.0)               # sigma = 2
        coef = t + (1.0 - mask) ** beta * (1.0 - t)
        bce = bce * coef
    # else: coef == 1 everywhere
    return jnp.mean(bce)


# ----------------------------------------------------------------------------
# SetCriterion_cl forward (losses = ['labels', 'cardinality'])
# ----------------------------------------------------------------------------
COUNTER_CLASS_RATE = [
    0.0, 0.0, 0.193425917, 0.412129084, 0.188929963, 0.0781296833,
    0.0509541413, 0.0312718553, 0.018483365, 0.0083924468, 0.00659406534,
    0.00449595364, 0.00219802178, 0.00179838146, 0.000599460486,
    0.000499550405, 0.000499550405, 0.000199820162, 0.000299730243,
    0.000399640324, 0.000299730243, 0.0, 0.000199820162, 0.0, 0.0, 0.0,
    9.99100809e-05, 9.99100809e-05,
]


def set_criterion_cl_forward(outputs, targets, cfg):
    pred_logits = outputs['pred_logits']        # (B, Q, C)
    pred_count = outputs['pred_count']          # (B, max_length + 1)
    B, Q, C = pred_logits.shape
    num_classes = cfg['num_classes']
    assert C == num_classes

    # TODO(synk): Hungarian matcher not translatable; deterministic identity match.
    indices = [(jnp.arange(int(t['labels'].shape[0]), dtype=jnp.int32),
                jnp.arange(int(t['labels'].shape[0]), dtype=jnp.int32))
               for t in targets]

    # num_boxes (world_size == 1, clamp min 1)
    num_boxes = max(sum(int(t['labels'].shape[0]) for t in targets), 1)

    # int32 class-id map; the dense one-hot is built inside the kernel.
    target_classes = jnp.full((B, Q), num_classes, dtype=jnp.int32)
    for b, (src, tgt_j) in enumerate(indices):
        target_classes = target_classes.at[b, src].set(targets[b]['labels'][tgt_j])

    focal_sums, card_counts = fused_focal_cardinality(
        pred_logits, target_classes,
        focal_alpha=cfg['focal_alpha'], focal_gamma=cfg['focal_gamma'])

    # sigmoid_focal_loss = sum/Q/num_boxes and loss_labels multiplies by Q, so the
    # /Q and *Q cancel exactly: loss_ce = total_sum / num_boxes.
    loss_ce = jnp.sum(focal_sums) / jnp.float32(num_boxes)

    tgt_lengths = jnp.array([int(t['labels'].shape[0]) for t in targets],
                            dtype=jnp.float32)
    cardinality_error = jnp.mean(jnp.abs(card_counts - tgt_lengths))

    max_length = pred_count.shape[1] - 1
    counter_target = jnp.array(
        [min(int(t['boxes'].shape[0]), max_length) for t in targets],
        dtype=jnp.int32)
    weight = cfg['counter_class_rate'][:max_length + 1]
    loss_counter = counter_loss_jnp(
        pred_count, counter_target, weight,
        gau_mask=bool(cfg['lloss_gau_mask']), beta=float(cfg['lloss_beta']))

    return {
        'loss_ce': loss_ce,
        'loss_counter': loss_counter,
        'cardinality_error': cardinality_error,
    }


if __name__ == "__main__":
    key = jax.random.PRNGKey(0)
    B, Q, num_classes = 2, 8, 4
    max_length = 7

    k1, k2 = jax.random.split(key)
    pred_logits = jax.random.normal(k1, (B, Q, num_classes), dtype=jnp.float32)
    pred_count = jax.random.normal(k2, (B, max_length + 1), dtype=jnp.float32)

    targets = [
        {'labels': jnp.array([0, 2, 1], dtype=jnp.int32),
         'boxes': jnp.zeros((3, 2), dtype=jnp.float32)},
        {'labels': jnp.array([3, 1, 0, 2, 2], dtype=jnp.int32),
         'boxes': jnp.zeros((5, 2), dtype=jnp.float32)},
    ]
    outputs = {'pred_logits': pred_logits, 'pred_count': pred_count}

    cfg = dict(
        num_classes=num_classes,
        focal_alpha=0.25,
        focal_gamma=2.0,
        lloss_gau_mask=1,
        lloss_beta=1.0,
        counter_class_rate=jnp.array(COUNTER_CLASS_RATE, dtype=jnp.float32),
    )

    losses = set_criterion_cl_forward(outputs, targets, cfg)
    losses = jax.tree_util.tree_map(jax.block_until_ready, losses)
    print("KERNEL_OK")
</pallas_src>

<mosaic_0001>
module attributes {stable_mosaic.version = 11 : i64} {
  func.func @_focal_card_kernel(%arg0: i32, %arg1: i32, %arg2: memref<1x8x4xf32, #tpu.memory_space<vmem>>, %arg3: memref<1x8x1xi32, #tpu.memory_space<vmem>>, %arg4: memref<2xf32, #tpu.memory_space<smem>>, %arg5: memref<2xf32, #tpu.memory_space<smem>>) attributes {dimension_semantics = [#tpu.dimension_semantics<parallel>, #tpu.dimension_semantics<arbitrary>], iteration_bounds = array<i64: 2, 1>, scalar_prefetch = 0 : i64, scratch_operands = 0 : i64, tpu.core_type = #tpu.core_type<tc>, window_params = [{transform_indices = @transform_0, window_bounds = array<i64: 1, 8, 4>}, {transform_indices = @transform_1, window_bounds = array<i64: 1, 8, 1>}, {transform_indices = @transform_2, window_bounds = array<i64: 2>}, {transform_indices = @transform_3, window_bounds = array<i64: 2>}]} {
    %c0_i32 = arith.constant 0 : i32
    %0 = arith.cmpi eq, %arg1, %c0_i32 : i32
    %1 = arith.extui %0 : i1 to i32
    %c0_i32_0 = arith.constant 0 : i32
    %2 = arith.cmpi ne, %1, %c0_i32_0 : i32
    scf.if %2 {
      %cst_21 = arith.constant 0.000000e+00 : f32
      %75 = arith.index_cast %arg0 : i32 to index
      %76 = memref.load %arg4[%75] : memref<2xf32, #tpu.memory_space<smem>>
      memref.store %cst_21, %arg4[%75] : memref<2xf32, #tpu.memory_space<smem>>
      %cst_22 = arith.constant 0.000000e+00 : f32
      %77 = arith.index_cast %arg0 : i32 to index
      %78 = memref.load %arg5[%77] : memref<2xf32, #tpu.memory_space<smem>>
      memref.store %cst_22, %arg5[%77] : memref<2xf32, #tpu.memory_space<smem>>
    } else {
    }
    %c0 = arith.constant 0 : index
    %c0_1 = arith.constant 0 : index
    %c0_2 = arith.constant 0 : index
    %3 = vector.load %arg2[%c0, %c0_1, %c0_2] : memref<1x8x4xf32, #tpu.memory_space<vmem>>, vector<1x8x4xf32>
    %4 = vector.shape_cast %3 : vector<1x8x4xf32> to vector<8x4xf32>
    %c0_3 = arith.constant 0 : index
    %c0_4 = arith.constant 0 : index
    %c0_5 = arith.constant 0 : index
    %5 = vector.load %arg3[%c0_3, %c0_4, %c0_5] : memref<1x8x1xi32, #tpu.memory_space<vmem>>, vector<1x8x1xi32>
    %6 = vector.shape_cast %5 : vector<1x8x1xi32> to vector<8x1xi32>
    %7 = tpu.iota {dimensions = array<i32: 1>} : vector<8x4xi32>
    %8 = vector.broadcast %6 : vector<8x1xi32> to vector<8x4xi32>
    %9 = arith.cmpi eq, %7, %8 : vector<8x4xi32>
    %10 = arith.extui %9 : vector<8x4xi1> to vector<8x4xi32>
    %11 = arith.sitofp %10 : vector<8x4xi32> to vector<8x4xf32>
    %cst = arith.constant 0.000000e+00 : f32
    %12 = vector.broadcast %cst : f32 to vector<8x4xf32>
    %13 = arith.subf %12, %4 : vector<8x4xf32>
    %14 = math.exp %13 : vector<8x4xf32>
    %cst_6 = arith.constant 1.000000e+00 : f32
    %15 = vector.broadcast %cst_6 : f32 to vector<8x4xf32>
    %16 = arith.addf %15, %14 : vector<8x4xf32>
    %17 = tpu.reciprocal %16 {approx = true} : vector<8x4xf32> -> vector<8x4xf32>
    %cst_7 = arith.constant 0.000000e+00 : f32
    %18 = vector.broadcast %cst_7 : f32 to vector<8x4xf32>
    %19 = arith.cmpf oge, %4, %18 : vector<8x4xf32>
    %cst_8 = arith.constant 1.000000e+00 : f32
    %20 = vector.broadcast %cst_8 : f32 to vector<8x4xf32>
    %21 = arith.subf %20, %17 : vector<8x4xf32>
    %22 = arith.select %19, %17, %21 : vector<8x4xi1>, vector<8x4xf32>
    %23 = math.log %22 : vector<8x4xf32>
    %cst_9 = arith.constant 0.000000e+00 : f32
    %24 = vector.broadcast %cst_9 : f32 to vector<8x4xf32>
    %25 = arith.maximumf %4, %24 : vector<8x4xf32>
    %26 = arith.mulf %4, %11 : vector<8x4xf32>
    %27 = arith.subf %25, %26 : vector<8x4xf32>
    %28 = arith.subf %27, %23 : vector<8x4xf32>
    %cst_10 = arith.constant 2.000000e+00 : f32
    %29 = vector.broadcast %cst_10 : f32 to vector<8x4xf32>
    %30 = arith.mulf %29, %17 : vector<8x4xf32>
    %cst_11 = arith.constant 1.000000e+00 : f32
    %31 = vector.broadcast %cst_11 : f32 to vector<8x4xf32>
    %32 = arith.subf %31, %30 : vector<8x4xf32>
    %33 = arith.mulf %11, %32 : vector<8x4xf32>
    %34 = arith.addf %17, %33 : vector<8x4xf32>
    %35 = arith.mulf %34, %34 : vector<8x4xf32>
    %36 = arith.mulf %28, %35 : vector<8x4xf32>
    %cst_12 = arith.constant -5.000000e-01 : f32
    %37 = vector.broadcast %cst_12 : f32 to vector<8x4xf32>
    %38 = arith.mulf %37, %11 : vector<8x4xf32>
    %cst_13 = arith.constant 7.500000e-01 : f32
    %39 = vector.broadcast %cst_13 : f32 to vector<8x4xf32>
    %40 = arith.addf %39, %38 : vector<8x4xf32>
    %41 = arith.mulf %40, %36 : vector<8x4xf32>
    %42 = arith.index_cast %arg0 : i32 to index
    %43 = memref.load %arg4[%42] : memref<2xf32, #tpu.memory_space<smem>>
    %44 = vector.shape_cast %41 : vector<8x4xf32> to vector<1x8x4xf32>
    %cst_14 = arith.constant dense<0.000000e+00> : vector<1xf32>
    %45 = vector.multi_reduction <add>, %44, %cst_14 [1, 2] : vector<1x8x4xf32> to vector<1xf32>
    %46 = vector.shape_cast %45 : vector<1xf32> to vector<1x1x1xf32>
    %47 = vector.extract %46[0, 0, 0] : f32 from vector<1x1x1xf32>
    %48 = arith.addf %43, %47 : f32
    %49 = arith.index_cast %arg0 : i32 to index
    %50 = memref.load %arg4[%49] : memref<2xf32, #tpu.memory_space<smem>>
    memref.store %48, %arg4[%49] : memref<2xf32, #tpu.memory_space<smem>>
    %c3_i32 = arith.constant 3 : i32
    %51 = vector.broadcast %c3_i32 : i32 to vector<8x4xi32>
    %52 = arith.cmpi slt, %7, %51 : vector<8x4xi32>
    %cst_15 = arith.constant 0xFF800000 : f32
    %53 = vector.broadcast %cst_15 : f32 to vector<8x4xf32>
    %54 = arith.select %52, %4, %53 : vector<8x4xi1>, vector<8x4xf32>
    %cst_16 = arith.constant dense<0xFF800000> : vector<8xf32>
    %55 = vector.multi_reduction <maximumf>, %54, %cst_16 [1] : vector<8x4xf32> to vector<8xf32>
    %56 = vector.shape_cast %55 : vector<8xf32> to vector<8x1xf32>
    %c3_i32_17 = arith.constant 3 : i32
    %57 = vector.broadcast %c3_i32_17 : i32 to vector<8x4xi32>
    %58 = arith.cmpi eq, %7, %57 : vector<8x4xi32>
    %cst_18 = arith.constant 0xFF800000 : f32
    %59 = vector.broadcast %cst_18 : f32 to vector<8x4xf32>
    %60 = arith.select %58, %4, %59 : vector<8x4xi1>, vector<8x4xf32>
    %cst_19 = arith.constant dense<0xFF800000> : vector<8xf32>
    %61 = vector.multi_reduction <maximumf>, %60, %cst_19 [1] : vector<8x4xf32> to vector<8xf32>
    %62 = vector.shape_cast %61 : vector<8xf32> to vector<8x1xf32>
    %63 = arith.cmpf oge, %56, %62 : vector<8x1xf32>
    %64 = arith.extui %63 : vector<8x1xi1> to vector<8x1xi32>
    %65 = arith.sitofp %64 : vector<8x1xi32> to vector<8x1xf32>
    %66 = arith.index_cast %arg0 : i32 to index
    %67 = memref.load %arg5[%66] : memref<2xf32, #tpu.memory_space<smem>>
    %68 = vector.shape_cast %65 : vector<8x1xf32> to vector<1x8x1xf32>
    %cst_20 = arith.constant dense<0.000000e+00> : vector<1xf32>
    %69 = vector.multi_reduction <add>, %68, %cst_20 [1, 2] : vector<1x8x1xf32> to vector<1xf32>
    %70 = vector.shape_cast %69 : vector<1xf32> to vector<1x1x1xf32>
    %71 = vector.extract %70[0, 0, 0] : f32 from vector<1x1x1xf32>
    %72 = arith.addf %67, %71 : f32
    %73 = arith.index_cast %arg0 : i32 to index
    %74 = memref.load %arg5[%73] : memref<2xf32, #tpu.memory_space<smem>>
    memref.store %72, %arg5[%73] : memref<2xf32, #tpu.memory_space<smem>>
    return
  }
  func.func @transform_0(%arg0: i32, %arg1: i32) -> (i32, i32, i32) {
    %c0_i32 = arith.constant 0 : i32
    %c0_i32_0 = arith.constant 0 : i32
    return %arg0, %arg1, %c0_i32 : i32, i32, i32
  }
  func.func @transform_1(%arg0: i32, %arg1: i32) -> (i32, i32, i32) {
    %c0_i32 = arith.constant 0 : i32
    %c0_i32_0 = arith.constant 0 : i32
    return %arg0, %arg1, %c0_i32 : i32, i32, i32
  }
  func.func @transform_2(%arg0: i32, %arg1: i32) -> i32 {
    %c0_i32 = arith.constant 0 : i32
    %c0_i32_0 = arith.constant 0 : i32
    return %c0_i32 : i32
  }
  func.func @transform_3(%arg0: i32, %arg1: i32) -> i32 {
    %c0_i32 = arith.constant 0 : i32
    %c0_i32_0 = arith.constant 0 : i32
    return %c0_i32 : i32
  }
}

</mosaic_0001>

<llo_original>
// kernel: tpu_custom_call.1
$region0: #{tpu_custom_call.1}
  #allocation0 [shape = 'u32[]', space=smem, size = 0x4, offset = 0x4, fixed_abs, tag = 'smem constant byte address 0x4 - core index']
  #allocation1 [shape = 'u32[144,128]{1,0:T(1,128)}', space=vmem, size = 0x12000, scoped, tag = 'internal scratch']
  %s0 = inlined_call_operand.vmem [shape: f32[2,8,4], index: 0, kind: input, shape index: {}]
  %s1 = inlined_call_operand.vmem [shape: s32[2,8,1], index: 1, kind: input, shape index: {}]
  %s2 = inlined_call_operand.hbm [shape: f32[2], index: 2, kind: output, shape index: {0}]
  %s3 = inlined_call_operand.hbm [shape: f32[2], index: 3, kind: output, shape index: {1}]
  %4 = xla_tuple %s2, %s3
  %s5 = sld [smem:[#allocation0]]
  $region53: #{tpu_custom_call.1} parent=0
    _
  %s7 = ssub.s32 1, %s5
  %s8 = scalar_select 0, %s7, %s5
  $region1: #{tpu_custom_call.1} parent=0
    #allocation2 [shape = 'u8[512]{0}', space=smem, size = 0x200, scoped, tag = 'output window, operand 0, single buffered']
    #allocation3 [shape = 's32[2]{0}', space=sflag, size = 0x8, scoped, tag = 'scoped memory for tpu_custom_call.1']
    #allocation4 [shape = 'u8[512]{0}', space=smem, size = 0x200, scoped, tag = 'output window, operand 1, single buffered']
    #allocation5 [shape = 's32[1]{0}', space=sflag, size = 0x4, scoped, tag = 'scoped memory for tpu_custom_call.1']
    %9 = vsyncpa [#allocation3], 0
    %10 = vsyncpa [#allocation5], 0
    loop: start=0, step=1, limit=4
    $region2: #{tpu_custom_call.1} parent=1 // loop_pre_header
      _
    $region3: #{tpu_custom_call.1} parent=1 // loop_header
      %s12 = sphi 0, %s16
      %p13 = scmp.ge.s32.totalorder %s12, 4
      %s19 = sphi 0, %s31
      %s20 = sphi 0, %s27
      %s21 = sphi 0, %s19
      %s22 = sphi 0, %s20
      %s23 = sphi 0, %s21
      %s24 = sphi 0, %s22
      %s36 = sphi 0, %s38
      %s39 = sphi 0, %s36
      %s40 = sphi 0, %s39
      %s56 = sphi 0, %s40
      %s64 = sphi 0, %s66
      %s67 = sphi 0, %s64
      %s68 = sphi 0, %s67
      %s84 = sphi 0, %s68
      %s88 = sphi 0, %s88
      %s90 = sphi 0, %s88
      %s91 = sphi 0, %s90
      %s105 = sphi 0, %s91
      %s109 = sphi 0, %s109
      %s111 = sphi 0, %s109
      %s112 = sphi 0, %s111
      %s126 = sphi 0, %s112
    $region4: #{tpu_custom_call.1} parent=1 // loop_header_branch
      %15 = sbr.rel (%p13) target = $region8
    $region5: #{tpu_custom_call.1} parent=1 // loop_body
      %s17 = ssub.s32 %s12, 1
      %s18 = ssub.s32 %s12, 2
      %s25 = sadd.s32 1, %s20
      %p26 = scmp.ge.s32.totalorder %s25, 1
      %s27 = scalar_select %p26, 0, %s25
      %s28 = sadd.s32 1, %s19
      %s29 = scalar_select %p26, %s28, %s19
      %p30 = scmp.ge.s32.totalorder %s29, 2
      %s31 = scalar_select %p30, 0, %s29
      %s32 = ssub.s32 %s19, %s31
      %s33 = ssub.s32 %s20, %s27
      %s34 = sor.u32 %s32, %s33
      %p35 = scmp.eq.s32.totalorder %s34, 0
      %s37 = sadd.s32 %s36, 1
      %s38 = scalar_select %p35, %s36, %s37
      %p41 = pneg %p35
      %p42 = scmp.eq.s32.totalorder %s12, 1
      %p43 = por %p41, %p42
      %p44 = scmp.ne.s32.totalorder %s36, %s39
      %p45 = scmp.eq.s32.totalorder %s12, 0
      %p46 = por %p44, %p45
      %p47 = scmp.ne.s32.totalorder %s36, %s39
      %p48 = scmp.eq.s32.totalorder %s17, 1
      %p49 = por %p47, %p48
      %p50 = scmp.ne.s32.totalorder %s39, %s40
      %p51 = scmp.eq.s32.totalorder %s17, 0
      %p52 = por %p50, %p51
      %p53 = scmp.ne.s32.totalorder %s39, %s40
      %p54 = scmp.eq.s32.totalorder %s18, 1
      %p55 = por %p53, %p54
      %p57 = scmp.ne.s32.totalorder %s40, %s56
      %p58 = scmp.eq.s32.totalorder %s18, 0
      %p59 = por %p57, %p58
      %s60 = ssub.s32 %s19, %s31
      %s61 = ssub.s32 %s20, %s27
      %s62 = sor.u32 %s60, %s61
      %p63 = scmp.eq.s32.totalorder %s62, 0
      %s65 = sadd.s32 %s64, 1
      %s66 = scalar_select %p63, %s64, %s65
      %p69 = pneg %p63
      %p70 = scmp.eq.s32.totalorder %s12, 1
      %p71 = por %p69, %p70
      %p72 = scmp.ne.s32.totalorder %s64, %s67
      %p73 = scmp.eq.s32.totalorder %s12, 0
      %p74 = por %p72, %p73
      %p75 = scmp.ne.s32.totalorder %s64, %s67
      %p76 = scmp.eq.s32.totalorder %s17, 1
      %p77 = por %p75, %p76
      %p78 = scmp.ne.s32.totalorder %s67, %s68
      %p79 = scmp.eq.s32.totalorder %s17, 0
      %p80 = por %p78, %p79
      %p81 = scmp.ne.s32.totalorder %s67, %s68
      %p82 = scmp.eq.s32.totalorder %s18, 1
      %p83 = por %p81, %p82
      %p85 = scmp.ne.s32.totalorder %s68, %s84
      %p86 = scmp.eq.s32.totalorder %s18, 0
      %p87 = por %p85, %p86
      %s89 = sadd.s32 %s88, 1
      %p92 = scmp.eq.s32.totalorder %s12, 1
      %p93 = scmp.ne.s32.totalorder %s88, %s90
      %p94 = scmp.eq.s32.totalorder %s12, 0
      %p95 = por %p93, %p94
      %p96 = scmp.ne.s32.totalorder %s88, %s90
      %p97 = scmp.eq.s32.totalorder %s17, 1
      %p98 = por %p96, %p97
      %p99 = scmp.ne.s32.totalorder %s90, %s91
      %p100 = scmp.eq.s32.totalorder %s17, 0
      %p101 = por %p99, %p100
      %p102 = scmp.ne.s32.totalorder %s90, %s91
      %p103 = scmp.eq.s32.totalorder %s18, 1
      %p104 = por %p102, %p103
      %p106 = scmp.ne.s32.totalorder %s91, %s105
      %p107 = scmp.eq.s32.totalorder %s18, 0
      %p108 = por %p106, %p107
      %s110 = sadd.s32 %s109, 1
      %p113 = scmp.eq.s32.totalorder %s12, 1
      %p114 = scmp.ne.s32.totalorder %s109, %s111
      %p115 = scmp.eq.s32.totalorder %s12, 0
      %p116 = por %p114, %p115
      %p117 = scmp.ne.s32.totalorder %s109, %s111
      %p118 = scmp.eq.s32.totalorder %s17, 1
      %p119 = por %p117, %p118
      %p120 = scmp.ne.s32.totalorder %s111, %s112
      %p121 = scmp.eq.s32.totalorder %s17, 0
      %p122 = por %p120, %p121
      %p123 = scmp.ne.s32.totalorder %s111, %s112
      %p124 = scmp.eq.s32.totalorder %s18, 1
      %p125 = por %p123, %p124
      %p127 = scmp.ne.s32.totalorder %s112, %s126
      %p128 = scmp.eq.s32.totalorder %s18, 0
      %p129 = por %p127, %p128
      %p130 = scmp.le.s32.totalorder 1, %s12
      %p131 = scmp.lt.s32.totalorder %s12, 3
      %p132 = pnand %p130, %p131
      %p133 = pneg %p132
      // Predicated region
      $region9: #{tpu_custom_call.1} parent=5 // pred_check
        _
      $region10: #{tpu_custom_call.1} parent=5 // pred_check_branch
        %135 = sbr.rel (%p132) target = $region12
      $region11: #{tpu_custom_call.1} parent=5 // pred_region
        %s136 = ssub.s32 %s12, 1
      $region12: #{tpu_custom_call.1} parent=5 // pred_fallthru
        _
      %p137 = scmp.lt.s32.totalorder %s12, 2
      // Predicated region
      $region13: #{tpu_custom_call.1} parent=5 // pred_check
        %p138 = pneg %p137
      $region14: #{tpu_custom_call.1} parent=5 // pred_check_branch
        %140 = sbr.rel (%p138) target = $region16
      $region15: #{tpu_custom_call.1} parent=5 // pred_region
        // Predicated region
        $region17: #{tpu_custom_call.1} parent=15 // pred_check
          %p141 = pneg %p46
        $region18: #{tpu_custom_call.1} parent=15 // pred_check_branch
          %143 = sbr.rel (%p141) target = $region20
        $region19: #{tpu_custom_call.1} parent=15 // pred_region
          %p144 = scmp.lt.s32.totalorder %s19, 1
          %s145 = scalar_select %p144, %s19, 1
          %p146 = scmp.lt.s32.totalorder %s20, 0
          %s147 = scalar_select %p146, %s20, 0
          %s148 = sadd.s32 %s147, %s145
          %s149 = smul.addr %s148, 8
          %s150 = scalar_lea.vmem %s0, %s149
        $region20: #{tpu_custom_call.1} parent=15 // pred_fallthru
          _
        // Predicated region
        $region21: #{tpu_custom_call.1} parent=15 // pred_check
          %p151 = pneg %p74
        $region22: #{tpu_custom_call.1} parent=15 // pred_check_branch
          %153 = sbr.rel (%p151) target = $region24
        $region23: #{tpu_custom_call.1} parent=15 // pred_region
          %p154 = scmp.lt.s32.totalorder %s19, 1
          %s155 = scalar_select %p154, %s19, 1
          %p156 = scmp.lt.s32.totalorder %s20, 0
          %s157 = scalar_select %p156, %s20, 0
          %s158 = sadd.s32 %s157, %s155
          %s159 = smul.addr %s158, 8
          %s160 = scalar_lea.vmem %s1, %s159
        $region24: #{tpu_custom_call.1} parent=15 // pred_fallthru
          _
      $region16: #{tpu_custom_call.1} parent=5 // pred_fallthru
        _
      %p161 = scmp.le.s32.totalorder 1, %s12
      %p162 = scmp.lt.s32.totalorder %s12, 3
      %p163 = pnand %p161, %p162
      %p164 = pneg %p163
      // Predicated region
      $region25: #{tpu_custom_call.1} parent=5 // pred_check
        _
      $region26: #{tpu_custom_call.1} parent=5 // pred_check_branch
        %166 = sbr.rel (%p163) target = $region28
      $region27: #{tpu_custom_call.1} parent=5 // pred_region
        %s167 = ssub.s32 %s12, 1
        %p168 = scmp.lt.s32.totalorder %s21, 1
        %s169 = scalar_select %p168, %s21, 1
        %p170 = scmp.lt.s32.totalorder %s22, 0
        %s171 = scalar_select %p170, %s22, 0
        %s172 = sadd.s32 %s171, %s169
        %s173 = smul.addr %s172, 8
        %s174 = scalar_lea.vmem %s0, %s173
        %p175 = pneg %p52
        %p176 = pneg %p49
        %p177 = scmp.lt.s32.totalorder %s21, 1
        %s178 = scalar_select %p177, %s21, 1
        %p179 = scmp.lt.s32.totalorder %s22, 0
        %s180 = scalar_select %p179, %s22, 0
        %s181 = sadd.s32 %s180, %s178
        %s182 = smul.addr %s181, 8
        %s183 = scalar_lea.vmem %s1, %s182
        %p184 = pneg %p80
        %p185 = pneg %p77
        %p186 = pneg %p101
        %p187 = pneg %p98
        %p188 = pneg %p122
        %p189 = pneg %p119
        %p190 = scmp.lt.s32.totalorder %s21, 1
        %s191 = scalar_select %p190, %s21, 1
        %p192 = scmp.lt.s32.totalorder %s22, 0
        %s193 = scalar_select %p192, %s22, 0
        %s194 = sadd.s32 %s193, %s191
        %s195 = smul.addr %s194, 8
        %s196 = scalar_lea.vmem %s0, %s195
        %p197 = scmp.lt.s32.totalorder %s21, 1
        %s198 = scalar_select %p197, %s21, 1
        %p199 = scmp.lt.s32.totalorder %s22, 0
        %s200 = scalar_select %p199, %s22, 0
        %s201 = sadd.s32 %s200, %s198
        %s202 = smul.addr %s201, 8
        %s203 = scalar_lea.vmem %s1, %s202
        %p204 = scmp.eq.s32.totalorder %s22, 0
        // Predicated region
        $region29: #{tpu_custom_call.1} parent=27 // pred_check
          %p205 = pneg %p204
        $region30: #{tpu_custom_call.1} parent=27 // pred_check_branch
          %207 = sbr.rel (%p205) target = $region32
        $region31: #{tpu_custom_call.1} parent=27 // pred_region
          %s208 = scalar_lea.smem [#allocation2], %s21
          %209 = sst [smem:[%s208]] 0.0
          %s210 = scalar_lea.smem [#allocation4], %s21
          %211 = sst [smem:[%s210]] 0.0
        $region32: #{tpu_custom_call.1} parent=27 // pred_fallthru
          _
        %v212 = vld [vmem:[%s196] sm:$0xff]
        %v213 = vld [vmem:[%s203] sm:$0xff]
        %v214 = vlaneseq
        %v215 = vand.u32 %v214, 127
        %216 = vset.pattern.permute.xlu0 0
        %217 = vperm.xlu0 %216, %v213
        %v218 = vpop.permute.xlu0 %217
        %vm219 = vcmp.eq.s32.totalorder %v215, %v218
        %v220 = vsel %vm219, 1, 0
        %v221 = vcvt.s32.f32 %v220
        %v222 = vsub.f32 0.0, %v212
        %v223 = vmul.f32 %v222, 1.442695
        %v224 = vpow.pop %v223
        %v225 = vadd.f32 %v224, 1.0
        %v226 = vrcp.pop %v225
        %vm227 = vcmp.ge.f32.partialorder %v212, 0.0
        %v228 = vsub.f32 1.0, %v226
        %v229 = vsel %vm227, %v226, %v228
        %v230 = vlog2.pop %v229
        %v231 = vmul.f32 %v230, 0.6931472
        %v232 = vmax.f32 %v212, 0.0
        %v233 = vmul.f32 %v212, %v221
        %v234 = vsub.f32 %v232, %v233
        %v235 = vsub.f32 %v234, %v231
        %v236 = vmul.f32 %v226, 2.0
        %v237 = vsub.f32 1.0, %v236
        %v238 = vmul.f32 %v221, %v237
        %v239 = vadd.f32 %v226, %v238
        %v240 = vmul.f32 %v239, %v239
        %v241 = vmul.f32 %v235, %v240
        %v242 = vmul.f32 %v221, -0.5
        %v243 = vadd.f32 %v242, 0.75
        %v244 = vmul.f32 %v243, %v241
        %s245 = sld [smem:[#allocation2 + %s21]]
        %vm246 = vcmask 31744
        %v247 = vsel %vm246, %v244, 0.0
        %248 = vadd.xlane.f32.xlu0 %v247
        %v249 = vpop.xlane.xlu0 %248
        %v250 = vrot.slane %v249, 4
        %v251 = vadd.f32 %v249, %v250
        %v252 = vrot.slane %v251, 2
        %v253 = vadd.f32 %v251, %v252
        %v254 = vrot.slane %v253, 1
        %v255 = vadd.f32 %v253, %v254
        %s256 = vtos %v255
        %s257 = sadd.f32 %s245, %s256
        %s258 = scalar_lea.smem [#allocation2], %s21
        %259 = sst [smem:[%s258]] %s257
        %vm260 = vcmp.lt.s32.totalorder %v215, 3
        %v261 = vsel %vm260, %v212, -inf
        %v262 = vsel %vm246, %v261, -inf
        %263 = vmax.xlane.f32.xlu0 %v262
        %v264 = vpop.xlane.xlu0 %263
        %vm265 = vcmp.eq.s32.totalorder %v215, 3
        %v266 = vsel %vm265, %v212, -inf
        %v267 = vsel %vm246, %v266, -inf
        %268 = vmax.xlane.f32.xlu0 %v267
        %v269 = vpop.xlane.xlu0 %268
        %vm270 = vcmp.ge.f32.partialorder %v264, %v269
        %v271 = vsel %vm270, 1, 0
        %v272 = vcvt.s32.f32 %v271
        %s273 = sld [smem:[#allocation4 + %s21]]
        %vm274 = vcmask 7168
        %v275 = vsel %vm274, %v272, 0.0
        %276 = vadd.xlane.f32.xlu0 %v275
        %v277 = vpop.xlane.xlu0 %276
        %v278 = vrot.slane %v277, 4
        %v279 = vadd.f32 %v277, %v278
        %v280 = vrot.slane %v279, 2
        %v281 = vadd.f32 %v279, %v280
        %v282 = vrot.slane %v281, 1
        %v283 = vadd.f32 %v281, %v282
        %s284 = vtos %v283
        %s285 = sadd.f32 %s273, %s284
        %s286 = scalar_lea.smem [#allocation4], %s21
        %287 = sst [smem:[%s286]] %s285
        // Predicated region
        $region33: #{tpu_custom_call.1} parent=27 // pred_check
          %p288 = pneg %p98
        $region34: #{tpu_custom_call.1} parent=27 // pred_check_branch
          %290 = sbr.rel (%p288) target = $region36
        $region35: #{tpu_custom_call.1} parent=27 // pred_region
          %s292 = ssub.s32 16, 16
          %293 = vsyncadd [#allocation3], %s292
          %296 = dma.smem_to_hbm [#allocation2], 16, %s2, [#allocation3]
        $region36: #{tpu_custom_call.1} parent=27 // pred_fallthru
          _
        // Predicated region
        $region37: #{tpu_custom_call.1} parent=27 // pred_check
          %p297 = pneg %p119
        $region38: #{tpu_custom_call.1} parent=27 // pred_check_branch
          %299 = sbr.rel (%p297) target = $region40
        $region39: #{tpu_custom_call.1} parent=27 // pred_region
          %s301 = ssub.s32 16, 16
          %302 = vsyncadd [#allocation5], %s301
          %305 = dma.smem_to_hbm [#allocation4], 16, %s3, [#allocation5]
        $region40: #{tpu_custom_call.1} parent=27 // pred_fallthru
          _
        // Predicated region
        $region41: #{tpu_custom_call.1} parent=27 // pred_check
          %p306 = pneg %p98
        $region42: #{tpu_custom_call.1} parent=27 // pred_check_branch
          %308 = sbr.rel (%p306) target = $region44
        $region43: #{tpu_custom_call.1} parent=27 // pred_region
          %309 = dma.done [#allocation3], 16
        $region44: #{tpu_custom_call.1} parent=27 // pred_fallthru
          _
        // Predicated region
        $region45: #{tpu_custom_call.1} parent=27 // pred_check
          %p310 = pneg %p119
        $region46: #{tpu_custom_call.1} parent=27 // pred_check_branch
          %312 = sbr.rel (%p310) target = $region48
        $region47: #{tpu_custom_call.1} parent=27 // pred_region
          %313 = dma.done [#allocation5], 16
        $region48: #{tpu_custom_call.1} parent=27 // pred_fallthru
          _
        %314 = sfence
      $region28: #{tpu_custom_call.1} parent=5 // pred_fallthru
        _
      %p315 = scmp.le.s32.totalorder 2, %s12
      // Predicated region
      $region49: #{tpu_custom_call.1} parent=5 // pred_check
        %p316 = pneg %p315
      $region50: #{tpu_custom_call.1} parent=5 // pred_check_branch
        %318 = sbr.rel (%p316) target = $region52
      $region51: #{tpu_custom_call.1} parent=5 // pred_region
        %s319 = ssub.s32 %s12, 2
      $region52: #{tpu_custom_call.1} parent=5 // pred_fallthru
        _
    $region6: #{tpu_custom_call.1} parent=1 // loop_footer
      %s16 = sadd.s32 1, %s12
    $region7: #{tpu_custom_call.1} parent=1 // loop_footer_branch
      %11 = sbr.rel target = $region3
    $region8: #{tpu_custom_call.1} parent=1 // loop_exit
      _
    %320 = vsyncpa [#allocation3], 1
    %s321 = scalar_lea.sflag [#allocation3], 1
    %322 = vsyncpa %s321, 1
    %323 = vsyncpa [#allocation5], 1

</llo_original>
